<compile_context>
chip_gen: v6e
topology: v6e:2x2x1
jax: 0.10.0
libtpu: 0.0.40
codegen_flags: <defaults>
</compile_context>

<pallas_src>
import functools

import jax
import jax.numpy as jnp
from jax.experimental import pallas as pl
from jax.experimental.pallas import tpu as pltpu  # noqa: F401  (TPU backend import)

# Below this much per-layer work the fixed pallas_call/custom-call + DMA overhead
# dominates and plain jitted XLA wins.
_TINY_WORK_THRESHOLD = 8 * 128      # ~one vreg of elements
_MXU_K_THRESHOLD = 32               # switch FMA-chain -> MXU dot at this contraction depth


def _round_up(x, m):
    return ((x + m - 1) // m) * m


def _slab_layout(input_size, hidden_size, num_classes, batch):
    """Lane/row layout of the packed parameter slab (single (8,128) tile at these sizes)."""
    IN, HID, CLS = input_size, hidden_size, num_classes
    lane_b1 = max(8, _round_up(max(HID, CLS), 8))       # clear of w1/w2 lanes
    lane_b2 = _round_up(lane_b1 + HID, 8)               # clear of b1 lanes
    rows = max(IN + HID, batch)
    width = max(128, _round_up(lane_b2 + CLS, 128))
    return rows, width, lane_b1, lane_b2


def _contract(a, w, k_dim):
    """a:(B,K) @ w:(K,N).  VPU broadcast-FMA chain for tiny K, MXU dot for large K."""
    if k_dim >= _MXU_K_THRESHOLD:
        return jnp.dot(a, w, preferred_element_type=jnp.float32)
    out = a[:, 0:1] * w[0:1, :]
    for k in range(1, k_dim):                            # static unroll
        out = out + a[:, k:k + 1] * w[k:k + 1, :]
    return out


def net_kernel(x_ref, p_ref, o_ref, *, input_size, hidden_size, num_classes,
               lane_b1, lane_b2):
    IN, HID, CLS = input_size, hidden_size, num_classes

    x = x_ref[...]                                       # (B, IN)  f32
    p = p_ref[...]                                       # (rows, 128) f32 -- one tile
    B = x.shape[0]

    w1 = p[0:IN, 0:HID]                                  # (IN, HID)
    w2 = p[IN:IN + HID, 0:CLS]                           # (HID, CLS)
    b1 = p[0:B, lane_b1:lane_b1 + HID]                   # (B, HID) pre-broadcast bias
    b2 = p[0:B, lane_b2:lane_b2 + CLS]                   # (B, CLS) pre-broadcast bias

    # Layer 1: x @ w1 + b1, tanh.
    h = jnp.tanh(_contract(x, w1, IN) + b1)              # (B, HID)
    # Layer 2: h @ w2 + b2.
    logits = _contract(h, w2, HID) + b2                  # (B, CLS)

    # softmax over dim=0 (batch axis), numerically stabilized, exact normalization.
    m = jnp.max(logits, axis=0, keepdims=True)           # (1, CLS)
    e = jnp.exp(logits - m)                              # EUP
    denom = jnp.sum(e, axis=0, keepdims=True)            # (1, CLS)
    o_ref[...] = (e / denom).astype(o_ref.dtype)


def pack_params(w1_t, b1, w2_t, b2, batch):
    """Pack all parameters into a single f32 slab (one operand, one tile-sized DMA)."""
    IN, HID = w1_t.shape
    _, CLS = w2_t.shape
    rows, width, lane_b1, lane_b2 = _slab_layout(IN, HID, CLS, batch)
    p = jnp.zeros((rows, width), jnp.float32)
    p = p.at[0:IN, 0:HID].set(w1_t)
    p = p.at[IN:IN + HID, 0:CLS].set(w2_t)
    p = p.at[0:batch, lane_b1:lane_b1 + HID].set(
        jnp.broadcast_to(b1.reshape(1, -1), (batch, HID)))
    p = p.at[0:batch, lane_b2:lane_b2 + CLS].set(
        jnp.broadcast_to(b2.reshape(1, -1), (batch, CLS)))
    return p


def net_forward_pallas(x, packed_params, *, input_size, hidden_size, num_classes,
                       lane_b1, lane_b2):
    B = x.shape[0]
    IN, HID, CLS = input_size, hidden_size, num_classes
    kernel = functools.partial(
        net_kernel,
        input_size=IN, hidden_size=HID, num_classes=CLS,
        lane_b1=lane_b1, lane_b2=lane_b2,
    )
    # Whole problem fits a single VMEM tile: grid=(), full-array blocks.
    full = lambda shape: pl.BlockSpec(shape, lambda: tuple(0 for _ in shape))

    flops = 2 * B * IN * HID + 2 * B * HID * CLS + 4 * B * CLS
    transcendentals = B * HID + B * CLS                       # tanh + exp
    bytes_accessed = 4 * (x.size + packed_params.size + B * CLS)

    return pl.pallas_call(
        kernel,
        out_shape=jax.ShapeDtypeStruct((B, CLS), jnp.float32),
        grid_spec=pl.GridSpec(
            grid=(),
            in_specs=[full(x.shape), full(packed_params.shape)],
            out_specs=full((B, CLS)),
        ),
        cost_estimate=pl.CostEstimate(
            flops=flops,
            transcendentals=transcendentals,
            bytes_accessed=bytes_accessed,
        ),
    )(x, packed_params)


def net_forward_xla(x, w1_t, b1, w2_t, b2):
    """Plain fused-XLA path (winner in the overhead-dominated tiny-shape regime)."""
    h = jnp.tanh(x @ w1_t + b1[None, :])
    logits = h @ w2_t + b2[None, :]
    return jax.nn.softmax(logits, axis=0)


def net_forward(x, w1_t, b1, w2_t, b2, *, force_pallas=False):
    """Shape-gated dispatcher: XLA for tiny shapes, Pallas kernel for the scaled path."""
    B, IN = x.shape
    HID = w1_t.shape[1]
    CLS = w2_t.shape[1]
    tiny = B * max(IN, HID, CLS) <= _TINY_WORK_THRESHOLD
    if tiny and not force_pallas:
        return net_forward_xla(x, w1_t, b1, w2_t, b2)
    packed = pack_params(w1_t, b1, w2_t, b2, B)
    _, _, lane_b1, lane_b2 = _slab_layout(IN, HID, CLS, B)
    return net_forward_pallas(
        x, packed,
        input_size=IN, hidden_size=HID, num_classes=CLS,
        lane_b1=lane_b1, lane_b2=lane_b2,
    )


if __name__ == "__main__":
    input_size = 3
    hidden_size = 4
    num_classes = 5
    batch = 8

    key = jax.random.PRNGKey(0)
    kx, kw1, kb1, kw2, kb2 = jax.random.split(key, 5)

    # Deterministic PyTorch-Linear-style init: uniform(-1/sqrt(fan_in), 1/sqrt(fan_in)).
    bound1 = 1.0 / (input_size ** 0.5)
    bound2 = 1.0 / (hidden_size ** 0.5)
    # Stored in (in, out) layout, i.e. already transposed vs torch's (out, in).
    w1_t = jax.random.uniform(kw1, (input_size, hidden_size), jnp.float32, -bound1, bound1)
    b1 = jax.random.uniform(kb1, (hidden_size,), jnp.float32, -bound1, bound1)
    w2_t = jax.random.uniform(kw2, (hidden_size, num_classes), jnp.float32, -bound2, bound2)
    b2 = jax.random.uniform(kb2, (num_classes,), jnp.float32, -bound2, bound2)

    x = jax.random.normal(kx, (batch, input_size), jnp.float32)

    # Run the Pallas kernel explicitly (bypassing the tiny-shape gate) to validate it.
    out_pallas = net_forward(x, w1_t, b1, w2_t, b2, force_pallas=True)
    out_pallas = jax.block_until_ready(out_pallas)

    # The gated dispatcher takes the fused-XLA path at this size (feedback item #1).
    out_gated = jax.block_until_ready(net_forward(x, w1_t, b1, w2_t, b2))

    # Reference check in plain JAX.
    ref = net_forward_xla(x, w1_t, b1, w2_t, b2)
    assert out_pallas.shape == (batch, num_classes)
    assert jnp.allclose(out_pallas, ref, atol=1e-4), "pallas kernel mismatch vs reference"
    assert jnp.allclose(out_gated, ref, atol=1e-6), "gated path mismatch vs reference"
    # Exact normalization: softmax columns (dim=0) sum to 1.
    assert jnp.allclose(jnp.sum(out_pallas, axis=0), 1.0, atol=1e-5)

    print("KERNEL_OK")
</pallas_src>

<mosaic_0001>
module attributes {stable_mosaic.version = 11 : i64} {
  func.func @net_kernel(%arg0: memref<8x3xf32, #tpu.memory_space<vmem>>, %arg1: memref<8x128xf32, #tpu.memory_space<vmem>>, %arg2: memref<8x5xf32, #tpu.memory_space<vmem>>) attributes {dimension_semantics = [], scalar_prefetch = 0 : i64, scratch_operands = 0 : i64, tpu.core_type = #tpu.core_type<tc>} {
    %c0 = arith.constant 0 : index
    %c0_0 = arith.constant 0 : index
    %0 = vector.load %arg0[%c0, %c0_0] : memref<8x3xf32, #tpu.memory_space<vmem>>, vector<8x3xf32>
    %c0_1 = arith.constant 0 : index
    %c0_2 = arith.constant 0 : index
    %1 = vector.load %arg1[%c0_1, %c0_2] : memref<8x128xf32, #tpu.memory_space<vmem>>, vector<8x128xf32>
    %2 = vector.extract_strided_slice %1 {offsets = [0, 0], sizes = [3, 4], strides = [1, 1]} : vector<8x128xf32> to vector<3x4xf32>
    %3 = vector.extract_strided_slice %1 {offsets = [3, 0], sizes = [4, 5], strides = [1, 1]} : vector<8x128xf32> to vector<4x5xf32>
    %4 = vector.extract_strided_slice %1 {offsets = [0, 8], sizes = [8, 4], strides = [1, 1]} : vector<8x128xf32> to vector<8x4xf32>
    %5 = vector.extract_strided_slice %1 {offsets = [0, 16], sizes = [8, 5], strides = [1, 1]} : vector<8x128xf32> to vector<8x5xf32>
    %6 = vector.extract_strided_slice %0 {offsets = [0, 0], sizes = [8, 1], strides = [1, 1]} : vector<8x3xf32> to vector<8x1xf32>
    %7 = vector.extract_strided_slice %2 {offsets = [0, 0], sizes = [1, 4], strides = [1, 1]} : vector<3x4xf32> to vector<1x4xf32>
    %8 = vector.broadcast %6 : vector<8x1xf32> to vector<8x4xf32>
    %9 = vector.broadcast %7 : vector<1x4xf32> to vector<8x4xf32>
    %10 = arith.mulf %8, %9 : vector<8x4xf32>
    %11 = vector.extract_strided_slice %0 {offsets = [0, 1], sizes = [8, 1], strides = [1, 1]} : vector<8x3xf32> to vector<8x1xf32>
    %12 = vector.extract_strided_slice %2 {offsets = [1, 0], sizes = [1, 4], strides = [1, 1]} : vector<3x4xf32> to vector<1x4xf32>
    %13 = vector.broadcast %11 : vector<8x1xf32> to vector<8x4xf32>
    %14 = vector.broadcast %12 : vector<1x4xf32> to vector<8x4xf32>
    %15 = arith.mulf %13, %14 : vector<8x4xf32>
    %16 = arith.addf %10, %15 : vector<8x4xf32>
    %17 = vector.extract_strided_slice %0 {offsets = [0, 2], sizes = [8, 1], strides = [1, 1]} : vector<8x3xf32> to vector<8x1xf32>
    %18 = vector.extract_strided_slice %2 {offsets = [2, 0], sizes = [1, 4], strides = [1, 1]} : vector<3x4xf32> to vector<1x4xf32>
    %19 = vector.broadcast %17 : vector<8x1xf32> to vector<8x4xf32>
    %20 = vector.broadcast %18 : vector<1x4xf32> to vector<8x4xf32>
    %21 = arith.mulf %19, %20 : vector<8x4xf32>
    %22 = arith.addf %16, %21 : vector<8x4xf32>
    %23 = arith.addf %22, %4 : vector<8x4xf32>
    %24 = math.tanh %23 : vector<8x4xf32>
    %25 = vector.extract_strided_slice %24 {offsets = [0, 0], sizes = [8, 1], strides = [1, 1]} : vector<8x4xf32> to vector<8x1xf32>
    %26 = vector.extract_strided_slice %3 {offsets = [0, 0], sizes = [1, 5], strides = [1, 1]} : vector<4x5xf32> to vector<1x5xf32>
    %27 = vector.broadcast %25 : vector<8x1xf32> to vector<8x5xf32>
    %28 = vector.broadcast %26 : vector<1x5xf32> to vector<8x5xf32>
    %29 = arith.mulf %27, %28 : vector<8x5xf32>
    %30 = vector.extract_strided_slice %24 {offsets = [0, 1], sizes = [8, 1], strides = [1, 1]} : vector<8x4xf32> to vector<8x1xf32>
    %31 = vector.extract_strided_slice %3 {offsets = [1, 0], sizes = [1, 5], strides = [1, 1]} : vector<4x5xf32> to vector<1x5xf32>
    %32 = vector.broadcast %30 : vector<8x1xf32> to vector<8x5xf32>
    %33 = vector.broadcast %31 : vector<1x5xf32> to vector<8x5xf32>
    %34 = arith.mulf %32, %33 : vector<8x5xf32>
    %35 = arith.addf %29, %34 : vector<8x5xf32>
    %36 = vector.extract_strided_slice %24 {offsets = [0, 2], sizes = [8, 1], strides = [1, 1]} : vector<8x4xf32> to vector<8x1xf32>
    %37 = vector.extract_strided_slice %3 {offsets = [2, 0], sizes = [1, 5], strides = [1, 1]} : vector<4x5xf32> to vector<1x5xf32>
    %38 = vector.broadcast %36 : vector<8x1xf32> to vector<8x5xf32>
    %39 = vector.broadcast %37 : vector<1x5xf32> to vector<8x5xf32>
    %40 = arith.mulf %38, %39 : vector<8x5xf32>
    %41 = arith.addf %35, %40 : vector<8x5xf32>
    %42 = vector.extract_strided_slice %24 {offsets = [0, 3], sizes = [8, 1], strides = [1, 1]} : vector<8x4xf32> to vector<8x1xf32>
    %43 = vector.extract_strided_slice %3 {offsets = [3, 0], sizes = [1, 5], strides = [1, 1]} : vector<4x5xf32> to vector<1x5xf32>
    %44 = vector.broadcast %42 : vector<8x1xf32> to vector<8x5xf32>
    %45 = vector.broadcast %43 : vector<1x5xf32> to vector<8x5xf32>
    %46 = arith.mulf %44, %45 : vector<8x5xf32>
    %47 = arith.addf %41, %46 : vector<8x5xf32>
    %48 = arith.addf %47, %5 : vector<8x5xf32>
    %cst = arith.constant dense<0xFF800000> : vector<5xf32>
    %49 = vector.multi_reduction <maximumf>, %48, %cst [0] : vector<8x5xf32> to vector<5xf32>
    %50 = vector.shape_cast %49 : vector<5xf32> to vector<1x5xf32>
    %51 = vector.broadcast %50 : vector<1x5xf32> to vector<8x5xf32>
    %52 = arith.subf %48, %51 : vector<8x5xf32>
    %53 = math.exp %52 : vector<8x5xf32>
    %cst_3 = arith.constant dense<0.000000e+00> : vector<5xf32>
    %54 = vector.multi_reduction <add>, %53, %cst_3 [0] : vector<8x5xf32> to vector<5xf32>
    %55 = vector.shape_cast %54 : vector<5xf32> to vector<1x5xf32>
    %56 = vector.broadcast %55 : vector<1x5xf32> to vector<8x5xf32>
    %57 = arith.divf %53, %56 : vector<8x5xf32>
    %c0_4 = arith.constant 0 : index
    %c0_5 = arith.constant 0 : index
    %58 = vector.load %arg2[%c0_4, %c0_5] : memref<8x5xf32, #tpu.memory_space<vmem>>, vector<8x5xf32>
    tpu.vector_store %arg2[%c0_4, %c0_5], %57 {strides = array<i32>} : memref<8x5xf32, #tpu.memory_space<vmem>>, vector<8x5xf32>,
    return
  }
}

</mosaic_0001>

<llo_original>
// kernel: tpu_custom_call.1
$region0: #{tpu_custom_call.1}
  #allocation0 [shape = 'u32[]', space=smem, size = 0x4, offset = 0x4, fixed_abs, tag = 'smem constant byte address 0x4 - core index']
  #allocation1 [shape = 'u32[144,128]{1,0:T(1,128)}', space=vmem, size = 0x12000, scoped, tag = 'internal scratch']
  %s0 = inlined_call_operand.vmem [shape: f32[8,3], index: 0, kind: input, shape index: {}]
  %s1 = inlined_call_operand.vmem [shape: f32[8,128], index: 1, kind: input, shape index: {}]
  %s2 = inlined_call_operand.hbm [shape: f32[8,5], index: 2, kind: output, shape index: {}]
  %s3 = sld [smem:[#allocation0]]
  $region18: #{tpu_custom_call.1} parent=0
    _
  %s5 = ssub.s32 1, %s3
  %s6 = scalar_select 0, %s5, %s3
  $region1: #{tpu_custom_call.1} parent=0
    #allocation2 [shape = 'u8[4096]{0}', space=vmem, size = 0x1000, scoped, tag = 'output window, operand 0, single buffered']
    #allocation3 [shape = 's32[1]{0}', space=sflag, size = 0x4, scoped, tag = 'scoped memory for tpu_custom_call.1']
    %7 = vsyncpa [#allocation3], 0
    // Predicated region
    $region2: #{tpu_custom_call.1} parent=1 // pred_check
      _
    $region3: #{tpu_custom_call.1} parent=1 // pred_check_branch
      %9 = sbr.rel (0) target = $region5
    $region4: #{tpu_custom_call.1} parent=1 // pred_region
      _
    $region5: #{tpu_custom_call.1} parent=1 // pred_fallthru
      _
    // Predicated region
    $region6: #{tpu_custom_call.1} parent=1 // pred_check
      _
    $region7: #{tpu_custom_call.1} parent=1 // pred_check_branch
      %11 = sbr.rel (0) target = $region9
    $region8: #{tpu_custom_call.1} parent=1 // pred_region
      _
    $region9: #{tpu_custom_call.1} parent=1 // pred_fallthru
      _
    %v12 = vld [vmem:[%s0] sm:$0xff]
    %v13 = vld [vmem:[%s1] sm:$0xff]
    %15 = vset.pattern.permute.xlu0 0
    %16 = vperm.xlu0 %15, %v12
    %v17 = vpop.permute.xlu0 %16
    %v19 = vlaneseq
    %v20 = vshrl.u32 %v19, 7
    %v21 = vsub.s32 0, %v20
    %v22 = vrot.slane %v13, %v21
    %v23 = vmul.f32 %v17, %v22
    %24 = vset.pattern.permute.xlu0 1
    %25 = vperm.xlu0 %24, %v12
    %v26 = vpop.permute.xlu0 %25
    %v28 = vlaneseq
    %v29 = vshrl.u32 %v28, 7
    %v30 = vsub.s32 1, %v29
    %v31 = vrot.slane %v13, %v30
    %v32 = vmul.f32 %v26, %v31
    %v33 = vadd.f32 %v23, %v32
    %34 = vset.pattern.permute.xlu0 2
    %35 = vperm.xlu0 %34, %v12
    %v36 = vpop.permute.xlu0 %35
    %v38 = vlaneseq
    %v39 = vshrl.u32 %v38, 7
    %v40 = vsub.s32 2, %v39
    %v41 = vrot.slane %v13, %v40
    %v42 = vmul.f32 %v36, %v41
    %v43 = vadd.f32 %v33, %v42
    %45 = vrot.lane.b32.xlu0 %v13, 120
    %v46 = vpop.permute.xlu0 %45
    %v48 = vadd.f32 %v43, %v46
    %v49 = vtanh.pop %v48
    %51 = vset.pattern.permute.xlu0 0
    %52 = vperm.xlu0 %51, %v49
    %v53 = vpop.permute.xlu0 %52
    %v55 = vlaneseq
    %v56 = vshrl.u32 %v55, 7
    %v57 = vsub.s32 3, %v56
    %v58 = vrot.slane %v13, %v57
    %v59 = vmul.f32 %v53, %v58
    %60 = vset.pattern.permute.xlu0 1
    %61 = vperm.xlu0 %60, %v49
    %v62 = vpop.permute.xlu0 %61
    %v64 = vlaneseq
    %v65 = vshrl.u32 %v64, 7
    %v66 = vsub.s32 4, %v65
    %v67 = vrot.slane %v13, %v66
    %v68 = vmul.f32 %v62, %v67
    %v69 = vadd.f32 %v59, %v68
    %70 = vset.pattern.permute.xlu0 2
    %71 = vperm.xlu0 %70, %v49
    %v72 = vpop.permute.xlu0 %71
    %v74 = vlaneseq
    %v75 = vshrl.u32 %v74, 7
    %v76 = vsub.s32 5, %v75
    %v77 = vrot.slane %v13, %v76
    %v78 = vmul.f32 %v72, %v77
    %v79 = vadd.f32 %v69, %v78
    %80 = vset.pattern.permute.xlu0 3
    %81 = vperm.xlu0 %80, %v49
    %v82 = vpop.permute.xlu0 %81
    %v84 = vlaneseq
    %v85 = vshrl.u32 %v84, 7
    %v86 = vsub.s32 6, %v85
    %v87 = vrot.slane %v13, %v86
    %v88 = vmul.f32 %v82, %v87
    %v89 = vadd.f32 %v79, %v88
    %90 = vrot.lane.b32.xlu0 %v13, 112
    %v91 = vpop.permute.xlu0 %90
    %v93 = vadd.f32 %v89, %v91
    %vm94 = vcmask 39936
    %v95 = vsel %vm94, %v93, -inf
    %v96 = vrot.slane %v95, 4
    %v97 = vmax.f32 %v95, %v96
    %v98 = vrot.slane %v97, 2
    %v99 = vmax.f32 %v97, %v98
    %v100 = vrot.slane %v99, 1
    %v101 = vmax.f32 %v99, %v100
    %v102 = vsub.f32 %v93, %v101
    %v103 = vmul.f32 %v102, 1.442695
    %v104 = vpow.pop %v103
    %v105 = vsel %vm94, %v104, 0.0
    %v106 = vrot.slane %v105, 4
    %v107 = vadd.f32 %v105, %v106
    %v108 = vrot.slane %v107, 2
    %v109 = vadd.f32 %v107, %v108
    %v110 = vrot.slane %v109, 1
    %v111 = vadd.f32 %v109, %v110
    %v112 = vrcp.pop %v111
    %v113 = vmul.f32 %v104, %v112
    %114 = vst.msk [vmem:[#allocation2] sm:$0xff] %vm94, %v113
    // Predicated region
    $region10: #{tpu_custom_call.1} parent=1 // pred_check
      _
    $region11: #{tpu_custom_call.1} parent=1 // pred_check_branch
      %116 = sbr.rel (0) target = $region13
    $region12: #{tpu_custom_call.1} parent=1 // pred_region
      %s118 = ssub.s32 128, 128
      %119 = vsyncadd [#allocation3], %s118
      %s121 = sshll.u32 [#allocation2], 4
      %s122 = int_to_ptr.vmem [resolvable:$true] %s121
      %124 = dma.vmem_to_hbm [thread:$0]  %s122, 128, %s2, [#allocation3]
    $region13: #{tpu_custom_call.1} parent=1 // pred_fallthru
      _
    // Predicated region
    $region14: #{tpu_custom_call.1} parent=1 // pred_check
      _
    $region15: #{tpu_custom_call.1} parent=1 // pred_check_branch
      %126 = sbr.rel (0) target = $region17
    $region16: #{tpu_custom_call.1} parent=1 // pred_region
      %127 = dma.done [#allocation3], 128
    $region17: #{tpu_custom_call.1} parent=1 // pred_fallthru
      _
    %128 = vsyncpa [#allocation3], 1

</llo_original>
